<compile_context>
chip_gen: v5e
topology: v5e:2x2
jax: 0.10.0
libtpu: 0.0.40
codegen_flags: <defaults>
</compile_context>

<pallas_src>
import jax
import jax.numpy as jnp
from jax.experimental import pallas as pl
from jax.experimental.pallas import tpu as pltpu

_LANES = 128
_SMALL_FALLBACK_BYTES = 128 * 1024   # below this, plain jnp is strictly cheaper


def _sublane_multiple(dtype) -> int:
    """Rows per packed vreg tile: 8 for 32-bit, 16 for 16-bit, 32 for 8-bit dtypes."""
    itemsize = jnp.dtype(dtype).itemsize
    return max(8, 32 // max(itemsize, 1))


def _hardswish_jnp(x):
    """Pure-jnp reference / fallback path (keeps input dtype)."""
    return x * jnp.clip(x + 3.0, 0.0, 6.0) * (1.0 / 6.0)


def _chip_config():
    """Returns (target_block_bytes, vmem_limit_bytes_or_None, bf16_native, num_tensorcores)."""
    kind = ""
    try:
        kind = jax.devices()[0].device_kind.lower()
    except Exception:
        pass
    # Conservative defaults (v5e / unknown): 2 MiB blocks (8 MiB double-buffered
    # footprint fits the 16 MiB scoped-VMEM default), f32 compute, 1 TC.
    target_bytes = 2 * 1024 * 1024
    vmem_limit = None
    bf16_native = False
    num_tc = 1
    if "v7" in kind:
        # 8 MiB blocks -> 32 MiB footprint; set the limit explicitly (64 MiB physical).
        target_bytes = 8 * 1024 * 1024
        vmem_limit = 40 << 20
        bf16_native = True
        num_tc = 2
    elif "v6" in kind:
        # 4 MiB blocks -> 16 MiB footprint, inside the 32 MiB scoped default.
        target_bytes = 4 * 1024 * 1024
        bf16_native = True
    return target_bytes, vmem_limit, bf16_native, num_tc


def _make_kernel(compute_dtype):
    def _hardswish_kernel(x_ref, o_ref):
        x = x_ref[...].astype(compute_dtype)      # no-op when dtypes match
        y = x * jnp.clip(x + 3.0, 0.0, 6.0) * (1.0 / 6.0)
        o_ref[...] = y.astype(o_ref.dtype)
    return _hardswish_kernel


def hardswish(x: jax.Array) -> jax.Array:
    """Elementwise hardswish via Pallas. Works for any shape / float dtype."""
    orig_shape = x.shape
    orig_dtype = x.dtype
    n = x.size
    if n == 0:
        return x

    itemsize = jnp.dtype(orig_dtype).itemsize
    sub = _sublane_multiple(orig_dtype)
    tile_elems = sub * _LANES

    # Tiny-input fallback: launch/per-step overhead dominates; let XLA fuse it.
    if n < tile_elems or n * itemsize < _SMALL_FALLBACK_BYTES:
        return _hardswish_jnp(x)

    target_bytes, vmem_limit, bf16_native, num_tc = _chip_config()

    flat = x.reshape(-1)
    n_main = (n // tile_elems) * tile_elems       # tile-aligned prefix
    main = flat if n_main == n else flat[:n_main]

    rows = n_main // _LANES                       # multiple of `sub` by construction
    x2d = main.reshape(rows, _LANES)

    # Block rows: target chip-specific block bytes, rounded to the sublane multiple.
    target_rows = max(sub, (target_bytes // (_LANES * itemsize) // sub) * sub)
    br = min(target_rows, rows)
    if num_tc > 1 and rows >= num_tc * sub:
        # Guarantee >= num_tc blocks so both TensorCores (megacore) get work.
        br_split = ((pl.cdiv(rows, num_tc) + sub - 1) // sub) * sub
        br = min(br, br_split)

    grid = (pl.cdiv(rows, br),)                   # partial last block handled by Pallas

    if bf16_native and jnp.dtype(orig_dtype) == jnp.bfloat16:
        compute_dtype = jnp.bfloat16
    else:
        compute_dtype = jnp.float32

    compiler_kwargs = dict(dimension_semantics=("parallel",))
    if vmem_limit is not None:
        compiler_kwargs["vmem_limit_bytes"] = vmem_limit

    out2d = pl.pallas_call(
        _make_kernel(compute_dtype),
        out_shape=jax.ShapeDtypeStruct((rows, _LANES), orig_dtype),
        grid=grid,
        in_specs=[pl.BlockSpec((br, _LANES), lambda i: (i, 0))],
        out_specs=pl.BlockSpec((br, _LANES), lambda i: (i, 0)),
        compiler_params=pltpu.CompilerParams(**compiler_kwargs),
    )(x2d)

    out_main = out2d.reshape(-1)
    if n_main != n:
        # Sub-tile tail (< sub*128 elements): plain jnp, no padding round trips.
        tail = _hardswish_jnp(flat[n_main:])
        out_flat = jnp.concatenate([out_main, tail])
    else:
        out_flat = out_main
    return out_flat.reshape(orig_shape)


def _hardswish_ref_f32(x):
    xf = x.astype(jnp.float32)
    return xf * jnp.clip(xf + 3.0, 0.0, 6.0) / 6.0


if __name__ == "__main__":
    key = jax.random.PRNGKey(0)
    k0, k1, k2 = jax.random.split(key, 3)

    # 1) NCHW input consistent with a MobileNetV3 activation (small -> jnp fallback path).
    x_small = jax.random.normal(k0, (2, 4, 16, 16), dtype=jnp.float32) * 4.0
    y_small = hardswish(x_small)
    jax.block_until_ready(y_small)
    assert y_small.shape == x_small.shape and y_small.dtype == x_small.dtype
    assert jnp.allclose(y_small, _hardswish_ref_f32(x_small), atol=1e-6, rtol=1e-5)

    # 2) Moderate f32 activation, tile-aligned -> pure Pallas path.
    x_f32 = jax.random.normal(k1, (2, 16, 56, 56), dtype=jnp.float32) * 4.0
    y_f32 = hardswish(x_f32)
    jax.block_until_ready(y_f32)
    assert y_f32.shape == x_f32.shape and y_f32.dtype == x_f32.dtype
    assert jnp.allclose(y_f32, _hardswish_ref_f32(x_f32), atol=1e-6, rtol=1e-5)

    # 3) bf16, non-tile-aligned size -> Pallas prefix + jnp tail path.
    x_bf16 = (jax.random.normal(k2, (2, 24, 37, 41), dtype=jnp.float32) * 4.0).astype(jnp.bfloat16)
    y_bf16 = hardswish(x_bf16)
    jax.block_until_ready(y_bf16)
    assert y_bf16.shape == x_bf16.shape and y_bf16.dtype == x_bf16.dtype
    assert jnp.allclose(y_bf16.astype(jnp.float32), _hardswish_ref_f32(x_bf16),
                        atol=3e-2, rtol=3e-2), "bf16 mismatch vs reference"

    print("KERNEL_OK")
</pallas_src>

<mosaic_0001>
module attributes {stable_mosaic.version = 11 : i64} {
  func.func @_hardswish_kernel(%arg0: i32, %arg1: memref<784x128xf32, #tpu.memory_space<vmem>>, %arg2: memref<784x128xf32, #tpu.memory_space<vmem>>) attributes {dimension_semantics = [#tpu.dimension_semantics<parallel>], iteration_bounds = array<i64: 1>, scalar_prefetch = 0 : i64, scratch_operands = 0 : i64, tpu.core_type = #tpu.core_type<tc>, window_params = [{transform_indices = @transform_0, window_bounds = array<i64: 784, 128>}, {transform_indices = @transform_1, window_bounds = array<i64: 784, 128>}]} {
    %c0 = arith.constant 0 : index
    %c0_0 = arith.constant 0 : index
    %0 = vector.load %arg1[%c0, %c0_0] : memref<784x128xf32, #tpu.memory_space<vmem>>, vector<784x128xf32>
    %cst = arith.constant 3.000000e+00 : f32
    %1 = vector.broadcast %cst : f32 to vector<784x128xf32>
    %2 = arith.addf %0, %1 : vector<784x128xf32>
    %cst_1 = arith.constant 0.000000e+00 : f32
    %cst_2 = arith.constant 6.000000e+00 : f32
    %3 = vector.broadcast %cst_1 : f32 to vector<784x128xf32>
    %4 = arith.maximumf %3, %2 : vector<784x128xf32>
    %5 = vector.broadcast %cst_2 : f32 to vector<784x128xf32>
    %6 = arith.minimumf %5, %4 : vector<784x128xf32>
    %7 = arith.mulf %0, %6 : vector<784x128xf32>
    %cst_3 = arith.constant 0.166666672 : f32
    %8 = vector.broadcast %cst_3 : f32 to vector<784x128xf32>
    %9 = arith.mulf %7, %8 : vector<784x128xf32>
    %c0_4 = arith.constant 0 : index
    %c0_5 = arith.constant 0 : index
    %10 = vector.load %arg2[%c0_4, %c0_5] : memref<784x128xf32, #tpu.memory_space<vmem>>, vector<784x128xf32>
    tpu.vector_store %arg2[%c0_4, %c0_5], %9 {strides = array<i32>} : memref<784x128xf32, #tpu.memory_space<vmem>>, vector<784x128xf32>,
    return
  }
  func.func @transform_0(%arg0: i32) -> (i32, i32) {
    %c0_i32 = arith.constant 0 : i32
    %c0_i32_0 = arith.constant 0 : i32
    return %arg0, %c0_i32 : i32, i32
  }
  func.func @transform_1(%arg0: i32) -> (i32, i32) {
    %c0_i32 = arith.constant 0 : i32
    %c0_i32_0 = arith.constant 0 : i32
    return %arg0, %c0_i32 : i32, i32
  }
}

</mosaic_0001>

<llo_original>
// kernel: tpu_custom_call.1
$region0: #{tpu_custom_call.1}
  #allocation0 [shape = 'u32[]', space=smem, size = 0x4, offset = 0x4, fixed_abs, tag = 'smem constant byte address 0x4 - core index']
  #allocation1 [shape = 'u32[72,128]{1,0:T(1,128)}', space=vmem, size = 0x9000, scoped, tag = 'internal scratch']
  %s0 = inlined_call_operand.hbm [shape: f32[784,128], index: 0, kind: input, shape index: {}]
  %s1 = inlined_call_operand.hbm [shape: f32[784,128], index: 1, kind: output, shape index: {}]
  %s2 = sld [smem:[#allocation0]]
  $region18: #{tpu_custom_call.1} parent=0
    _
  %s4 = ssub.s32 1, %s2
  %s5 = scalar_select 0, %s4, %s2
  $region1: #{tpu_custom_call.1} parent=0
    #allocation2 [shape = 'u8[401408]{0}', space=vmem, size = 0x62000, scoped, tag = 'input window, operand 0, single buffered']
    #allocation3 [shape = 's32[1]{0}', space=sflag, size = 0x4, scoped, tag = 'scoped memory for tpu_custom_call.1']
    #allocation4 [shape = 's32[1]{0}', space=sflag, size = 0x4, scoped, tag = 'scoped memory for tpu_custom_call.1']
    #allocation5 [shape = 'u8[401408]{0}', space=vmem, size = 0x62000, scoped, tag = 'output window, operand 0, single buffered']
    %6 = vsyncpa [#allocation3], 0
    %7 = vsyncpa [#allocation4], 0
    // Predicated region
    $region2: #{tpu_custom_call.1} parent=1 // pred_check
      _
    $region3: #{tpu_custom_call.1} parent=1 // pred_check_branch
      %9 = sbr.rel (0) target = $region5
    $region4: #{tpu_custom_call.1} parent=1 // pred_region
      %11 = vsyncadd [#allocation3], 0
      %s12 = sshll.u32 %s0, 4
      %s13 = int_to_ptr.hbm [resolvable:$true] %s12
      %s14 = sshll.u32 [#allocation2], 4
      %s15 = int_to_ptr.vmem [resolvable:$true] %s14
      %20 = dma.hbm_to_vmem [thread:$0]  %s13, 12544, %s15, [#allocation3], 128, 128, 8
    $region5: #{tpu_custom_call.1} parent=1 // pred_fallthru
      _
    // Predicated region
    $region6: #{tpu_custom_call.1} parent=1 // pred_check
      _
    $region7: #{tpu_custom_call.1} parent=1 // pred_check_branch
      %22 = sbr.rel (0) target = $region9
    $region8: #{tpu_custom_call.1} parent=1 // pred_region
      %24 = dma.done [#allocation3], 12544
    $region9: #{tpu_custom_call.1} parent=1 // pred_fallthru
      _
    %v25 = vld [vmem:[#allocation2] sm:$0xff]
    %v26 = vld [vmem:[#allocation2 + $0x8] sm:$0xff]
    %v27 = vld [vmem:[#allocation2 + $0x10] sm:$0xff]
    %v28 = vld [vmem:[#allocation2 + $0x18] sm:$0xff]
    %v29 = vld [vmem:[#allocation2 + $0x20] sm:$0xff]
    %v30 = vld [vmem:[#allocation2 + $0x28] sm:$0xff]
    %v31 = vld [vmem:[#allocation2 + $0x30] sm:$0xff]
    %v32 = vld [vmem:[#allocation2 + $0x38] sm:$0xff]
    %v33 = vld [vmem:[#allocation2 + $0x40] sm:$0xff]
    %v34 = vld [vmem:[#allocation2 + $0x48] sm:$0xff]
    %v35 = vld [vmem:[#allocation2 + $0x50] sm:$0xff]
    %v36 = vld [vmem:[#allocation2 + $0x58] sm:$0xff]
    %v37 = vld [vmem:[#allocation2 + $0x60] sm:$0xff]
    %v38 = vld [vmem:[#allocation2 + $0x68] sm:$0xff]
    %v39 = vld [vmem:[#allocation2 + $0x70] sm:$0xff]
    %v40 = vld [vmem:[#allocation2 + $0x78] sm:$0xff]
    %v41 = vld [vmem:[#allocation2 + $0x80] sm:$0xff]
    %v42 = vld [vmem:[#allocation2 + $0x88] sm:$0xff]
    %v43 = vld [vmem:[#allocation2 + $0x90] sm:$0xff]
    %v44 = vld [vmem:[#allocation2 + $0x98] sm:$0xff]
    %v45 = vld [vmem:[#allocation2 + $0xa0] sm:$0xff]
    %v46 = vld [vmem:[#allocation2 + $0xa8] sm:$0xff]
    %v47 = vld [vmem:[#allocation2 + $0xb0] sm:$0xff]
    %v48 = vld [vmem:[#allocation2 + $0xb8] sm:$0xff]
    %v49 = vld [vmem:[#allocation2 + $0xc0] sm:$0xff]
    %v50 = vld [vmem:[#allocation2 + $0xc8] sm:$0xff]
    %v51 = vld [vmem:[#allocation2 + $0xd0] sm:$0xff]
    %v52 = vld [vmem:[#allocation2 + $0xd8] sm:$0xff]
    %v53 = vld [vmem:[#allocation2 + $0xe0] sm:$0xff]
    %v54 = vld [vmem:[#allocation2 + $0xe8] sm:$0xff]
    %v55 = vld [vmem:[#allocation2 + $0xf0] sm:$0xff]
    %v56 = vld [vmem:[#allocation2 + $0xf8] sm:$0xff]
    %v57 = vld [vmem:[#allocation2 + $0x100] sm:$0xff]
    %v58 = vld [vmem:[#allocation2 + $0x108] sm:$0xff]
    %v59 = vld [vmem:[#allocation2 + $0x110] sm:$0xff]
    %v60 = vld [vmem:[#allocation2 + $0x118] sm:$0xff]
    %v61 = vld [vmem:[#allocation2 + $0x120] sm:$0xff]
    %v62 = vld [vmem:[#allocation2 + $0x128] sm:$0xff]
    %v63 = vld [vmem:[#allocation2 + $0x130] sm:$0xff]
    %v64 = vld [vmem:[#allocation2 + $0x138] sm:$0xff]
    %v65 = vld [vmem:[#allocation2 + $0x140] sm:$0xff]
    %v66 = vld [vmem:[#allocation2 + $0x148] sm:$0xff]
    %v67 = vld [vmem:[#allocation2 + $0x150] sm:$0xff]
    %v68 = vld [vmem:[#allocation2 + $0x158] sm:$0xff]
    %v69 = vld [vmem:[#allocation2 + $0x160] sm:$0xff]
    %v70 = vld [vmem:[#allocation2 + $0x168] sm:$0xff]
    %v71 = vld [vmem:[#allocation2 + $0x170] sm:$0xff]
    %v72 = vld [vmem:[#allocation2 + $0x178] sm:$0xff]
    %v73 = vld [vmem:[#allocation2 + $0x180] sm:$0xff]
    %v74 = vld [vmem:[#allocation2 + $0x188] sm:$0xff]
    %v75 = vld [vmem:[#allocation2 + $0x190] sm:$0xff]
    %v76 = vld [vmem:[#allocation2 + $0x198] sm:$0xff]
    %v77 = vld [vmem:[#allocation2 + $0x1a0] sm:$0xff]
    %v78 = vld [vmem:[#allocation2 + $0x1a8] sm:$0xff]
    %v79 = vld [vmem:[#allocation2 + $0x1b0] sm:$0xff]
    %v80 = vld [vmem:[#allocation2 + $0x1b8] sm:$0xff]
    %v81 = vld [vmem:[#allocation2 + $0x1c0] sm:$0xff]
    %v82 = vld [vmem:[#allocation2 + $0x1c8] sm:$0xff]
    %v83 = vld [vmem:[#allocation2 + $0x1d0] sm:$0xff]
    %v84 = vld [vmem:[#allocation2 + $0x1d8] sm:$0xff]
    %v85 = vld [vmem:[#allocation2 + $0x1e0] sm:$0xff]
    %v86 = vld [vmem:[#allocation2 + $0x1e8] sm:$0xff]
    %v87 = vld [vmem:[#allocation2 + $0x1f0] sm:$0xff]
    %v88 = vld [vmem:[#allocation2 + $0x1f8] sm:$0xff]
    %v89 = vld [vmem:[#allocation2 + $0x200] sm:$0xff]
    %v90 = vld [vmem:[#allocation2 + $0x208] sm:$0xff]
    %v91 = vld [vmem:[#allocation2 + $0x210] sm:$0xff]
    %v92 = vld [vmem:[#allocation2 + $0x218] sm:$0xff]
    %v93 = vld [vmem:[#allocation2 + $0x220] sm:$0xff]
    %v94 = vld [vmem:[#allocation2 + $0x228] sm:$0xff]
    %v95 = vld [vmem:[#allocation2 + $0x230] sm:$0xff]
    %v96 = vld [vmem:[#allocation2 + $0x238] sm:$0xff]
    %v97 = vld [vmem:[#allocation2 + $0x240] sm:$0xff]
    %v98 = vld [vmem:[#allocation2 + $0x248] sm:$0xff]
    %v99 = vld [vmem:[#allocation2 + $0x250] sm:$0xff]
    %v100 = vld [vmem:[#allocation2 + $0x258] sm:$0xff]
    %v101 = vld [vmem:[#allocation2 + $0x260] sm:$0xff]
    %v102 = vld [vmem:[#allocation2 + $0x268] sm:$0xff]
    %v103 = vld [vmem:[#allocation2 + $0x270] sm:$0xff]
    %v104 = vld [vmem:[#allocation2 + $0x278] sm:$0xff]
    %v105 = vld [vmem:[#allocation2 + $0x280] sm:$0xff]
    %v106 = vld [vmem:[#allocation2 + $0x288] sm:$0xff]
    %v107 = vld [vmem:[#allocation2 + $0x290] sm:$0xff]
    %v108 = vld [vmem:[#allocation2 + $0x298] sm:$0xff]
    %v109 = vld [vmem:[#allocation2 + $0x2a0] sm:$0xff]
    %v110 = vld [vmem:[#allocation2 + $0x2a8] sm:$0xff]
    %v111 = vld [vmem:[#allocation2 + $0x2b0] sm:$0xff]
    %v112 = vld [vmem:[#allocation2 + $0x2b8] sm:$0xff]
    %v113 = vld [vmem:[#allocation2 + $0x2c0] sm:$0xff]
    %v114 = vld [vmem:[#allocation2 + $0x2c8] sm:$0xff]
    %v115 = vld [vmem:[#allocation2 + $0x2d0] sm:$0xff]
    %v116 = vld [vmem:[#allocation2 + $0x2d8] sm:$0xff]
    %v117 = vld [vmem:[#allocation2 + $0x2e0] sm:$0xff]
    %v118 = vld [vmem:[#allocation2 + $0x2e8] sm:$0xff]
    %v119 = vld [vmem:[#allocation2 + $0x2f0] sm:$0xff]
    %v120 = vld [vmem:[#allocation2 + $0x2f8] sm:$0xff]
    %v121 = vld [vmem:[#allocation2 + $0x300] sm:$0xff]
    %v122 = vld [vmem:[#allocation2 + $0x308] sm:$0xff]
    %v123 = vadd.f32 %v25, 3.0
    %v124 = vadd.f32 %v26, 3.0
    %v125 = vadd.f32 %v27, 3.0
    %v126 = vadd.f32 %v28, 3.0
    %v127 = vadd.f32 %v29, 3.0
    %v128 = vadd.f32 %v30, 3.0
    %v129 = vadd.f32 %v31, 3.0
    %v130 = vadd.f32 %v32, 3.0
    %v131 = vadd.f32 %v33, 3.0
    %v132 = vadd.f32 %v34, 3.0
    %v133 = vadd.f32 %v35, 3.0
    %v134 = vadd.f32 %v36, 3.0
    %v135 = vadd.f32 %v37, 3.0
    %v136 = vadd.f32 %v38, 3.0
    %v137 = vadd.f32 %v39, 3.0
    %v138 = vadd.f32 %v40, 3.0
    %v139 = vadd.f32 %v41, 3.0
    %v140 = vadd.f32 %v42, 3.0
    %v141 = vadd.f32 %v43, 3.0
    %v142 = vadd.f32 %v44, 3.0
    %v143 = vadd.f32 %v45, 3.0
    %v144 = vadd.f32 %v46, 3.0
    %v145 = vadd.f32 %v47, 3.0
    %v146 = vadd.f32 %v48, 3.0
    %v147 = vadd.f32 %v49, 3.0
    %v148 = vadd.f32 %v50, 3.0
    %v149 = vadd.f32 %v51, 3.0
    %v150 = vadd.f32 %v52, 3.0
    %v151 = vadd.f32 %v53, 3.0
    %v152 = vadd.f32 %v54, 3.0
    %v153 = vadd.f32 %v55, 3.0
    %v154 = vadd.f32 %v56, 3.0
    %v155 = vadd.f32 %v57, 3.0
    %v156 = vadd.f32 %v58, 3.0
    %v157 = vadd.f32 %v59, 3.0
    %v158 = vadd.f32 %v60, 3.0
    %v159 = vadd.f32 %v61, 3.0
    %v160 = vadd.f32 %v62, 3.0
    %v161 = vadd.f32 %v63, 3.0
    %v162 = vadd.f32 %v64, 3.0
    %v163 = vadd.f32 %v65, 3.0
    %v164 = vadd.f32 %v66, 3.0
    %v165 = vadd.f32 %v67, 3.0
    %v166 = vadd.f32 %v68, 3.0
    %v167 = vadd.f32 %v69, 3.0
    %v168 = vadd.f32 %v70, 3.0
    %v169 = vadd.f32 %v71, 3.0
    %v170 = vadd.f32 %v72, 3.0
    %v171 = vadd.f32 %v73, 3.0
    %v172 = vadd.f32 %v74, 3.0
    %v173 = vadd.f32 %v75, 3.0
    %v174 = vadd.f32 %v76, 3.0
    %v175 = vadd.f32 %v77, 3.0
    %v176 = vadd.f32 %v78, 3.0
    %v177 = vadd.f32 %v79, 3.0
    %v178 = vadd.f32 %v80, 3.0
    %v179 = vadd.f32 %v81, 3.0
    %v180 = vadd.f32 %v82, 3.0
    %v181 = vadd.f32 %v83, 3.0
    %v182 = vadd.f32 %v84, 3.0
    %v183 = vadd.f32 %v85, 3.0
    %v184 = vadd.f32 %v86, 3.0
    %v185 = vadd.f32 %v87, 3.0
    %v186 = vadd.f32 %v88, 3.0
    %v187 = vadd.f32 %v89, 3.0
    %v188 = vadd.f32 %v90, 3.0
    %v189 = vadd.f32 %v91, 3.0
    %v190 = vadd.f32 %v92, 3.0
    %v191 = vadd.f32 %v93, 3.0
    %v192 = vadd.f32 %v94, 3.0
    %v193 = vadd.f32 %v95, 3.0
    %v194 = vadd.f32 %v96, 3.0
    %v195 = vadd.f32 %v97, 3.0
    %v196 = vadd.f32 %v98, 3.0
    %v197 = vadd.f32 %v99, 3.0
    %v198 = vadd.f32 %v100, 3.0
    %v199 = vadd.f32 %v101, 3.0
    %v200 = vadd.f32 %v102, 3.0
    %v201 = vadd.f32 %v103, 3.0
    %v202 = vadd.f32 %v104, 3.0
    %v203 = vadd.f32 %v105, 3.0
    %v204 = vadd.f32 %v106, 3.0
    %v205 = vadd.f32 %v107, 3.0
    %v206 = vadd.f32 %v108, 3.0
    %v207 = vadd.f32 %v109, 3.0
    %v208 = vadd.f32 %v110, 3.0
    %v209 = vadd.f32 %v111, 3.0
    %v210 = vadd.f32 %v112, 3.0
    %v211 = vadd.f32 %v113, 3.0
    %v212 = vadd.f32 %v114, 3.0
    %v213 = vadd.f32 %v115, 3.0
    %v214 = vadd.f32 %v116, 3.0
    %v215 = vadd.f32 %v117, 3.0
    %v216 = vadd.f32 %v118, 3.0
    %v217 = vadd.f32 %v119, 3.0
    %v218 = vadd.f32 %v120, 3.0
    %v219 = vadd.f32 %v121, 3.0
    %v220 = vadd.f32 %v122, 3.0
    %v221 = vmax.f32 %v123, 0.0
    %v222 = vmax.f32 %v124, 0.0
    %v223 = vmax.f32 %v125, 0.0
    %v224 = vmax.f32 %v126, 0.0
    %v225 = vmax.f32 %v127, 0.0
    %v226 = vmax.f32 %v128, 0.0
    %v227 = vmax.f32 %v129, 0.0
    %v228 = vmax.f32 %v130, 0.0
    %v229 = vmax.f32 %v131, 0.0
    %v230 = vmax.f32 %v132, 0.0
    %v231 = vmax.f32 %v133, 0.0
    %v232 = vmax.f32 %v134, 0.0
    %v233 = vmax.f32 %v135, 0.0
    %v234 = vmax.f32 %v136, 0.0
    %v235 = vmax.f32 %v137, 0.0
    %v236 = vmax.f32 %v138, 0.0
    %v237 = vmax.f32 %v139, 0.0
    %v238 = vmax.f32 %v140, 0.0
    %v239 = vmax.f32 %v141, 0.0
    %v240 = vmax.f32 %v142, 0.0
    %v241 = vmax.f32 %v143, 0.0
    %v242 = vmax.f32 %v144, 0.0
    %v243 = vmax.f32 %v145, 0.0
    %v244 = vmax.f32 %v146, 0.0
    %v245 = vmax.f32 %v147, 0.0
    %v246 = vmax.f32 %v148, 0.0
    %v247 = vmax.f32 %v149, 0.0
    %v248 = vmax.f32 %v150, 0.0
    %v249 = vmax.f32 %v151, 0.0
    %v250 = vmax.f32 %v152, 0.0
    %v251 = vmax.f32 %v153, 0.0
    %v252 = vmax.f32 %v154, 0.0
    %v253 = vmax.f32 %v155, 0.0
    %v254 = vmax.f32 %v156, 0.0
    %v255 = vmax.f32 %v157, 0.0
    %v256 = vmax.f32 %v158, 0.0
    %v257 = vmax.f32 %v159, 0.0
    %v258 = vmax.f32 %v160, 0.0
    %v259 = vmax.f32 %v161, 0.0
    %v260 = vmax.f32 %v162, 0.0
    %v261 = vmax.f32 %v163, 0.0
    %v262 = vmax.f32 %v164, 0.0
    %v263 = vmax.f32 %v165, 0.0
    %v264 = vmax.f32 %v166, 0.0
    %v265 = vmax.f32 %v167, 0.0
    %v266 = vmax.f32 %v168, 0.0
    %v267 = vmax.f32 %v169, 0.0
    %v268 = vmax.f32 %v170, 0.0
    %v269 = vmax.f32 %v171, 0.0
    %v270 = vmax.f32 %v172, 0.0
    %v271 = vmax.f32 %v173, 0.0
    %v272 = vmax.f32 %v174, 0.0
    %v273 = vmax.f32 %v175, 0.0
    %v274 = vmax.f32 %v176, 0.0
    %v275 = vmax.f32 %v177, 0.0
    %v276 = vmax.f32 %v178, 0.0
    %v277 = vmax.f32 %v179, 0.0
    %v278 = vmax.f32 %v180, 0.0
    %v279 = vmax.f32 %v181, 0.0
    %v280 = vmax.f32 %v182, 0.0
    %v281 = vmax.f32 %v183, 0.0
    %v282 = vmax.f32 %v184, 0.0
    %v283 = vmax.f32 %v185, 0.0
    %v284 = vmax.f32 %v186, 0.0
    %v285 = vmax.f32 %v187, 0.0
    %v286 = vmax.f32 %v188, 0.0
    %v287 = vmax.f32 %v189, 0.0
    %v288 = vmax.f32 %v190, 0.0
    %v289 = vmax.f32 %v191, 0.0
    %v290 = vmax.f32 %v192, 0.0
    %v291 = vmax.f32 %v193, 0.0
    %v292 = vmax.f32 %v194, 0.0
    %v293 = vmax.f32 %v195, 0.0
    %v294 = vmax.f32 %v196, 0.0
    %v295 = vmax.f32 %v197, 0.0
    %v296 = vmax.f32 %v198, 0.0
    %v297 = vmax.f32 %v199, 0.0
    %v298 = vmax.f32 %v200, 0.0
    %v299 = vmax.f32 %v201, 0.0
    %v300 = vmax.f32 %v202, 0.0
    %v301 = vmax.f32 %v203, 0.0
    %v302 = vmax.f32 %v204, 0.0
    %v303 = vmax.f32 %v205, 0.0
    %v304 = vmax.f32 %v206, 0.0
    %v305 = vmax.f32 %v207, 0.0
    %v306 = vmax.f32 %v208, 0.0
    %v307 = vmax.f32 %v209, 0.0
    %v308 = vmax.f32 %v210, 0.0
    %v309 = vmax.f32 %v211, 0.0
    %v310 = vmax.f32 %v212, 0.0
    %v311 = vmax.f32 %v213, 0.0
    %v312 = vmax.f32 %v214, 0.0
    %v313 = vmax.f32 %v215, 0.0
    %v314 = vmax.f32 %v216, 0.0
    %v315 = vmax.f32 %v217, 0.0
    %v316 = vmax.f32 %v218, 0.0
    %v317 = vmax.f32 %v219, 0.0
    %v318 = vmax.f32 %v220, 0.0
    %v319 = vmin.f32 %v221, 6.0
    %v320 = vmin.f32 %v222, 6.0
    %v321 = vmin.f32 %v223, 6.0
    %v322 = vmin.f32 %v224, 6.0
    %v323 = vmin.f32 %v225, 6.0
    %v324 = vmin.f32 %v226, 6.0
    %v325 = vmin.f32 %v227, 6.0
    %v326 = vmin.f32 %v228, 6.0
    %v327 = vmin.f32 %v229, 6.0
    %v328 = vmin.f32 %v230, 6.0
    %v329 = vmin.f32 %v231, 6.0
    %v330 = vmin.f32 %v232, 6.0
    %v331 = vmin.f32 %v233, 6.0
    %v332 = vmin.f32 %v234, 6.0
    %v333 = vmin.f32 %v235, 6.0
    %v334 = vmin.f32 %v236, 6.0
    %v335 = vmin.f32 %v237, 6.0
    %v336 = vmin.f32 %v238, 6.0
    %v337 = vmin.f32 %v239, 6.0
    %v338 = vmin.f32 %v240, 6.0
    %v339 = vmin.f32 %v241, 6.0
    %v340 = vmin.f32 %v242, 6.0
    %v341 = vmin.f32 %v243, 6.0
    %v342 = vmin.f32 %v244, 6.0
    %v343 = vmin.f32 %v245, 6.0
    %v344 = vmin.f32 %v246, 6.0
    %v345 = vmin.f32 %v247, 6.0
    %v346 = vmin.f32 %v248, 6.0
    %v347 = vmin.f32 %v249, 6.0
    %v348 = vmin.f32 %v250, 6.0
    %v349 = vmin.f32 %v251, 6.0
    %v350 = vmin.f32 %v252, 6.0
    %v351 = vmin.f32 %v253, 6.0
    %v352 = vmin.f32 %v254, 6.0
    %v353 = vmin.f32 %v255, 6.0
    %v354 = vmin.f32 %v256, 6.0
    %v355 = vmin.f32 %v257, 6.0
    %v356 = vmin.f32 %v258, 6.0
    %v357 = vmin.f32 %v259, 6.0
    %v358 = vmin.f32 %v260, 6.0
    %v359 = vmin.f32 %v261, 6.0
    %v360 = vmin.f32 %v262, 6.0
    %v361 = vmin.f32 %v263, 6.0
    %v362 = vmin.f32 %v264, 6.0
    %v363 = vmin.f32 %v265, 6.0
    %v364 = vmin.f32 %v266, 6.0
    %v365 = vmin.f32 %v267, 6.0
    %v366 = vmin.f32 %v268, 6.0
    %v367 = vmin.f32 %v269, 6.0
    %v368 = vmin.f32 %v270, 6.0
    %v369 = vmin.f32 %v271, 6.0
    %v370 = vmin.f32 %v272, 6.0
    %v371 = vmin.f32 %v273, 6.0
    %v372 = vmin.f32 %v274, 6.0
    %v373 = vmin.f32 %v275, 6.0
    %v374 = vmin.f32 %v276, 6.0
    %v375 = vmin.f32 %v277, 6.0
    %v376 = vmin.f32 %v278, 6.0
    %v377 = vmin.f32 %v279, 6.0
    %v378 = vmin.f32 %v280, 6.0
    %v379 = vmin.f32 %v281, 6.0
    %v380 = vmin.f32 %v282, 6.0
    %v381 = vmin.f32 %v283, 6.0
    %v382 = vmin.f32 %v284, 6.0
    %v383 = vmin.f32 %v285, 6.0
    %v384 = vmin.f32 %v286, 6.0
    %v385 = vmin.f32 %v287, 6.0
    %v386 = vmin.f32 %v288, 6.0
    %v387 = vmin.f32 %v289, 6.0
    %v388 = vmin.f32 %v290, 6.0
    %v389 = vmin.f32 %v291, 6.0
    %v390 = vmin.f32 %v292, 6.0
    %v391 = vmin.f32 %v293, 6.0
    %v392 = vmin.f32 %v294, 6.0
    %v393 = vmin.f32 %v295, 6.0
    %v394 = vmin.f32 %v296, 6.0
    %v395 = vmin.f32 %v297, 6.0
    %v396 = vmin.f32 %v298, 6.0
    %v397 = vmin.f32 %v299, 6.0
    %v398 = vmin.f32 %v300, 6.0
    %v399 = vmin.f32 %v301, 6.0
    %v400 = vmin.f32 %v302, 6.0
    %v401 = vmin.f32 %v303, 6.0
    %v402 = vmin.f32 %v304, 6.0
    %v403 = vmin.f32 %v305, 6.0
    %v404 = vmin.f32 %v306, 6.0
    %v405 = vmin.f32 %v307, 6.0
    %v406 = vmin.f32 %v308, 6.0
    %v407 = vmin.f32 %v309, 6.0
    %v408 = vmin.f32 %v310, 6.0
    %v409 = vmin.f32 %v311, 6.0
    %v410 = vmin.f32 %v312, 6.0
    %v411 = vmin.f32 %v313, 6.0
    %v412 = vmin.f32 %v314, 6.0
    %v413 = vmin.f32 %v315, 6.0
    %v414 = vmin.f32 %v316, 6.0
    %v415 = vmin.f32 %v317, 6.0
    %v416 = vmin.f32 %v318, 6.0
    %v417 = vmul.f32 %v25, %v319
    %v418 = vmul.f32 %v26, %v320
    %v419 = vmul.f32 %v27, %v321
    %v420 = vmul.f32 %v28, %v322
    %v421 = vmul.f32 %v29, %v323
    %v422 = vmul.f32 %v30, %v324
    %v423 = vmul.f32 %v31, %v325
    %v424 = vmul.f32 %v32, %v326
    %v425 = vmul.f32 %v33, %v327
    %v426 = vmul.f32 %v34, %v328
    %v427 = vmul.f32 %v35, %v329
    %v428 = vmul.f32 %v36, %v330
    %v429 = vmul.f32 %v37, %v331
    %v430 = vmul.f32 %v38, %v332
    %v431 = vmul.f32 %v39, %v333
    %v432 = vmul.f32 %v40, %v334
    %v433 = vmul.f32 %v41, %v335
    %v434 = vmul.f32 %v42, %v336
    %v435 = vmul.f32 %v43, %v337
    %v436 = vmul.f32 %v44, %v338
    %v437 = vmul.f32 %v45, %v339
    %v438 = vmul.f32 %v46, %v340
    %v439 = vmul.f32 %v47, %v341
    %v440 = vmul.f32 %v48, %v342
    %v441 = vmul.f32 %v49, %v343
    %v442 = vmul.f32 %v50, %v344
    %v443 = vmul.f32 %v51, %v345
    %v444 = vmul.f32 %v52, %v346
    %v445 = vmul.f32 %v53, %v347
    %v446 = vmul.f32 %v54, %v348
    %v447 = vmul.f32 %v55, %v349
    %v448 = vmul.f32 %v56, %v350
    %v449 = vmul.f32 %v57, %v351
    %v450 = vmul.f32 %v58, %v352
    %v451 = vmul.f32 %v59, %v353
    %v452 = vmul.f32 %v60, %v354
    %v453 = vmul.f32 %v61, %v355
    %v454 = vmul.f32 %v62, %v356
    %v455 = vmul.f32 %v63, %v357
    %v456 = vmul.f32 %v64, %v358
    %v457 = vmul.f32 %v65, %v359
    %v458 = vmul.f32 %v66, %v360
    %v459 = vmul.f32 %v67, %v361
    %v460 = vmul.f32 %v68, %v362
    %v461 = vmul.f32 %v69, %v363
    %v462 = vmul.f32 %v70, %v364
    %v463 = vmul.f32 %v71, %v365
    %v464 = vmul.f32 %v72, %v366
    %v465 = vmul.f32 %v73, %v367
    %v466 = vmul.f32 %v74, %v368
    %v467 = vmul.f32 %v75, %v369
    %v468 = vmul.f32 %v76, %v370
    %v469 = vmul.f32 %v77, %v371
    %v470 = vmul.f32 %v78, %v372
    %v471 = vmul.f32 %v79, %v373
    %v472 = vmul.f32 %v80, %v374
    %v473 = vmul.f32 %v81, %v375
    %v474 = vmul.f32 %v82, %v376
    %v475 = vmul.f32 %v83, %v377
    %v476 = vmul.f32 %v84, %v378
    %v477 = vmul.f32 %v85, %v379
    %v478 = vmul.f32 %v86, %v380
    %v479 = vmul.f32 %v87, %v381
    %v480 = vmul.f32 %v88, %v382
    %v481 = vmul.f32 %v89, %v383
    %v482 = vmul.f32 %v90, %v384
    %v483 = vmul.f32 %v91, %v385
    %v484 = vmul.f32 %v92, %v386
    %v485 = vmul.f32 %v93, %v387
    %v486 = vmul.f32 %v94, %v388
    %v487 = vmul.f32 %v95, %v389
    %v488 = vmul.f32 %v96, %v390
    %v489 = vmul.f32 %v97, %v391
    %v490 = vmul.f32 %v98, %v392
    %v491 = vmul.f32 %v99, %v393
    %v492 = vmul.f32 %v100, %v394
    %v493 = vmul.f32 %v101, %v395
    %v494 = vmul.f32 %v102, %v396
    %v495 = vmul.f32 %v103, %v397
    %v496 = vmul.f32 %v104, %v398
    %v497 = vmul.f32 %v105, %v399
    %v498 = vmul.f32 %v106, %v400
    %v499 = vmul.f32 %v107, %v401
    %v500 = vmul.f32 %v108, %v402
    %v501 = vmul.f32 %v109, %v403
    %v502 = vmul.f32 %v110, %v404
    %v503 = vmul.f32 %v111, %v405
    %v504 = vmul.f32 %v112, %v406
    %v505 = vmul.f32 %v113, %v407
    %v506 = vmul.f32 %v114, %v408
    %v507 = vmul.f32 %v115, %v409
    %v508 = vmul.f32 %v116, %v410
    %v509 = vmul.f32 %v117, %v411
    %v510 = vmul.f32 %v118, %v412
    %v511 = vmul.f32 %v119, %v413
    %v512 = vmul.f32 %v120, %v414
    %v513 = vmul.f32 %v121, %v415
    %v514 = vmul.f32 %v122, %v416
    %v515 = vmul.f32 %v417, 0.16666667
    %v516 = vmul.f32 %v418, 0.16666667
    %v517 = vmul.f32 %v419, 0.16666667
    %v518 = vmul.f32 %v420, 0.16666667
    %v519 = vmul.f32 %v421, 0.16666667
    %v520 = vmul.f32 %v422, 0.16666667
    %v521 = vmul.f32 %v423, 0.16666667
    %v522 = vmul.f32 %v424, 0.16666667
    %v523 = vmul.f32 %v425, 0.16666667
    %v524 = vmul.f32 %v426, 0.16666667
    %v525 = vmul.f32 %v427, 0.16666667
    %v526 = vmul.f32 %v428, 0.16666667
    %v527 = vmul.f32 %v429, 0.16666667
    %v528 = vmul.f32 %v430, 0.16666667
    %v529 = vmul.f32 %v431, 0.16666667
    %v530 = vmul.f32 %v432, 0.16666667
    %v531 = vmul.f32 %v433, 0.16666667
    %v532 = vmul.f32 %v434, 0.16666667
    %v533 = vmul.f32 %v435, 0.16666667
    %v534 = vmul.f32 %v436, 0.16666667
    %v535 = vmul.f32 %v437, 0.16666667
    %v536 = vmul.f32 %v438, 0.16666667
    %v537 = vmul.f32 %v439, 0.16666667
    %v538 = vmul.f32 %v440, 0.16666667
    %v539 = vmul.f32 %v441, 0.16666667
    %v540 = vmul.f32 %v442, 0.16666667
    %v541 = vmul.f32 %v443, 0.16666667
    %v542 = vmul.f32 %v444, 0.16666667
    %v543 = vmul.f32 %v445, 0.16666667
    %v544 = vmul.f32 %v446, 0.16666667
    %v545 = vmul.f32 %v447, 0.16666667
    %v546 = vmul.f32 %v448, 0.16666667
    %v547 = vmul.f32 %v449, 0.16666667
    %v548 = vmul.f32 %v450, 0.16666667
    %v549 = vmul.f32 %v451, 0.16666667
    %v550 = vmul.f32 %v452, 0.16666667
    %v551 = vmul.f32 %v453, 0.16666667
    %v552 = vmul.f32 %v454, 0.16666667
    %v553 = vmul.f32 %v455, 0.16666667
    %v554 = vmul.f32 %v456, 0.16666667
    %v555 = vmul.f32 %v457, 0.16666667
    %v556 = vmul.f32 %v458, 0.16666667
    %v557 = vmul.f32 %v459, 0.16666667
    %v558 = vmul.f32 %v460, 0.16666667
    %v559 = vmul.f32 %v461, 0.16666667
    %v560 = vmul.f32 %v462, 0.16666667
    %v561 = vmul.f32 %v463, 0.16666667
    %v562 = vmul.f32 %v464, 0.16666667
    %v563 = vmul.f32 %v465, 0.16666667
    %v564 = vmul.f32 %v466, 0.16666667
    %v565 = vmul.f32 %v467, 0.16666667
    %v566 = vmul.f32 %v468, 0.16666667
    %v567 = vmul.f32 %v469, 0.16666667
    %v568 = vmul.f32 %v470, 0.16666667
    %v569 = vmul.f32 %v471, 0.16666667
    %v570 = vmul.f32 %v472, 0.16666667
    %v571 = vmul.f32 %v473, 0.16666667
    %v572 = vmul.f32 %v474, 0.16666667
    %v573 = vmul.f32 %v475, 0.16666667
    %v574 = vmul.f32 %v476, 0.16666667
    %v575 = vmul.f32 %v477, 0.16666667
    %v576 = vmul.f32 %v478, 0.16666667
    %v577 = vmul.f32 %v479, 0.16666667
    %v578 = vmul.f32 %v480, 0.16666667
    %v579 = vmul.f32 %v481, 0.16666667
    %v580 = vmul.f32 %v482, 0.16666667
    %v581 = vmul.f32 %v483, 0.16666667
    %v582 = vmul.f32 %v484, 0.16666667
    %v583 = vmul.f32 %v485, 0.16666667
    %v584 = vmul.f32 %v486, 0.16666667
    %v585 = vmul.f32 %v487, 0.16666667
    %v586 = vmul.f32 %v488, 0.16666667
    %v587 = vmul.f32 %v489, 0.16666667
    %v588 = vmul.f32 %v490, 0.16666667
    %v589 = vmul.f32 %v491, 0.16666667
    %v590 = vmul.f32 %v492, 0.16666667
    %v591 = vmul.f32 %v493, 0.16666667
    %v592 = vmul.f32 %v494, 0.16666667
    %v593 = vmul.f32 %v495, 0.16666667
    %v594 = vmul.f32 %v496, 0.16666667
    %v595 = vmul.f32 %v497, 0.16666667
    %v596 = vmul.f32 %v498, 0.16666667
    %v597 = vmul.f32 %v499, 0.16666667
    %v598 = vmul.f32 %v500, 0.16666667
    %v599 = vmul.f32 %v501, 0.16666667
    %v600 = vmul.f32 %v502, 0.16666667
    %v601 = vmul.f32 %v503, 0.16666667
    %v602 = vmul.f32 %v504, 0.16666667
    %v603 = vmul.f32 %v505, 0.16666667
    %v604 = vmul.f32 %v506, 0.16666667
    %v605 = vmul.f32 %v507, 0.16666667
    %v606 = vmul.f32 %v508, 0.16666667
    %v607 = vmul.f32 %v509, 0.16666667
    %v608 = vmul.f32 %v510, 0.16666667
    %v609 = vmul.f32 %v511, 0.16666667
    %v610 = vmul.f32 %v512, 0.16666667
    %v611 = vmul.f32 %v513, 0.16666667
    %v612 = vmul.f32 %v514, 0.16666667
    %613 = vst [vmem:[#allocation5] sm:$0xff] %v515
    %614 = vst [vmem:[#allocation5 + $0x8] sm:$0xff] %v516
    %615 = vst [vmem:[#allocation5 + $0x10] sm:$0xff] %v517
    %616 = vst [vmem:[#allocation5 + $0x18] sm:$0xff] %v518
    %617 = vst [vmem:[#allocation5 + $0x20] sm:$0xff] %v519
    %618 = vst [vmem:[#allocation5 + $0x28] sm:$0xff] %v520
    %619 = vst [vmem:[#allocation5 + $0x30] sm:$0xff] %v521
    %620 = vst [vmem:[#allocation5 + $0x38] sm:$0xff] %v522
    %621 = vst [vmem:[#allocation5 + $0x40] sm:$0xff] %v523
    %622 = vst [vmem:[#allocation5 + $0x48] sm:$0xff] %v524
    %623 = vst [vmem:[#allocation5 + $0x50] sm:$0xff] %v525
    %624 = vst [vmem:[#allocation5 + $0x58] sm:$0xff] %v526
    %625 = vst [vmem:[#allocation5 + $0x60] sm:$0xff] %v527
    %626 = vst [vmem:[#allocation5 + $0x68] sm:$0xff] %v528
    %627 = vst [vmem:[#allocation5 + $0x70] sm:$0xff] %v529
    %628 = vst [vmem:[#allocation5 + $0x78] sm:$0xff] %v530
    %629 = vst [vmem:[#allocation5 + $0x80] sm:$0xff] %v531
    %630 = vst [vmem:[#allocation5 + $0x88] sm:$0xff] %v532
    %631 = vst [vmem:[#allocation5 + $0x90] sm:$0xff] %v533
    %632 = vst [vmem:[#allocation5 + $0x98] sm:$0xff] %v534
    %633 = vst [vmem:[#allocation5 + $0xa0] sm:$0xff] %v535
    %634 = vst [vmem:[#allocation5 + $0xa8] sm:$0xff] %v536
    %635 = vst [vmem:[#allocation5 + $0xb0] sm:$0xff] %v537
    %636 = vst [vmem:[#allocation5 + $0xb8] sm:$0xff] %v538
    %637 = vst [vmem:[#allocation5 + $0xc0] sm:$0xff] %v539
    %638 = vst [vmem:[#allocation5 + $0xc8] sm:$0xff] %v540
    %639 = vst [vmem:[#allocation5 + $0xd0] sm:$0xff] %v541
    %640 = vst [vmem:[#allocation5 + $0xd8] sm:$0xff] %v542
    %641 = vst [vmem:[#allocation5 + $0xe0] sm:$0xff] %v543
    %642 = vst [vmem:[#allocation5 + $0xe8] sm:$0xff] %v544
    %643 = vst [vmem:[#allocation5 + $0xf0] sm:$0xff] %v545
    %644 = vst [vmem:[#allocation5 + $0xf8] sm:$0xff] %v546
    %645 = vst [vmem:[#allocation5 + $0x100] sm:$0xff] %v547
    %646 = vst [vmem:[#allocation5 + $0x108] sm:$0xff] %v548
    %647 = vst [vmem:[#allocation5 + $0x110] sm:$0xff] %v549
    %648 = vst [vmem:[#allocation5 + $0x118] sm:$0xff] %v550
    %649 = vst [vmem:[#allocation5 + $0x120] sm:$0xff] %v551
    %650 = vst [vmem:[#allocation5 + $0x128] sm:$0xff] %v552
    %651 = vst [vmem:[#allocation5 + $0x130] sm:$0xff] %v553
    %652 = vst [vmem:[#allocation5 + $0x138] sm:$0xff] %v554
    %653 = vst [vmem:[#allocation5 + $0x140] sm:$0xff] %v555
    %654 = vst [vmem:[#allocation5 + $0x148] sm:$0xff] %v556
    %655 = vst [vmem:[#allocation5 + $0x150] sm:$0xff] %v557
    %656 = vst [vmem:[#allocation5 + $0x158] sm:$0xff] %v558
    %657 = vst [vmem:[#allocation5 + $0x160] sm:$0xff] %v559
    %658 = vst [vmem:[#allocation5 + $0x168] sm:$0xff] %v560
    %659 = vst [vmem:[#allocation5 + $0x170] sm:$0xff] %v561
    %660 = vst [vmem:[#allocation5 + $0x178] sm:$0xff] %v562
    %661 = vst [vmem:[#allocation5 + $0x180] sm:$0xff] %v563
    %662 = vst [vmem:[#allocation5 + $0x188] sm:$0xff] %v564
    %663 = vst [vmem:[#allocation5 + $0x190] sm:$0xff] %v565
    %664 = vst [vmem:[#allocation5 + $0x198] sm:$0xff] %v566
    %665 = vst [vmem:[#allocation5 + $0x1a0] sm:$0xff] %v567
    %666 = vst [vmem:[#allocation5 + $0x1a8] sm:$0xff] %v568
    %667 = vst [vmem:[#allocation5 + $0x1b0] sm:$0xff] %v569
    %668 = vst [vmem:[#allocation5 + $0x1b8] sm:$0xff] %v570
    %669 = vst [vmem:[#allocation5 + $0x1c0] sm:$0xff] %v571
    %670 = vst [vmem:[#allocation5 + $0x1c8] sm:$0xff] %v572
    %671 = vst [vmem:[#allocation5 + $0x1d0] sm:$0xff] %v573
    %672 = vst [vmem:[#allocation5 + $0x1d8] sm:$0xff] %v574
    %673 = vst [vmem:[#allocation5 + $0x1e0] sm:$0xff] %v575
    %674 = vst [vmem:[#allocation5 + $0x1e8] sm:$0xff] %v576
    %675 = vst [vmem:[#allocation5 + $0x1f0] sm:$0xff] %v577
    %676 = vst [vmem:[#allocation5 + $0x1f8] sm:$0xff] %v578
    %677 = vst [vmem:[#allocation5 + $0x200] sm:$0xff] %v579
    %678 = vst [vmem:[#allocation5 + $0x208] sm:$0xff] %v580
    %679 = vst [vmem:[#allocation5 + $0x210] sm:$0xff] %v581
    %680 = vst [vmem:[#allocation5 + $0x218] sm:$0xff] %v582
    %681 = vst [vmem:[#allocation5 + $0x220] sm:$0xff] %v583
    %682 = vst [vmem:[#allocation5 + $0x228] sm:$0xff] %v584
    %683 = vst [vmem:[#allocation5 + $0x230] sm:$0xff] %v585
    %684 = vst [vmem:[#allocation5 + $0x238] sm:$0xff] %v586
    %685 = vst [vmem:[#allocation5 + $0x240] sm:$0xff] %v587
    %686 = vst [vmem:[#allocation5 + $0x248] sm:$0xff] %v588
    %687 = vst [vmem:[#allocation5 + $0x250] sm:$0xff] %v589
    %688 = vst [vmem:[#allocation5 + $0x258] sm:$0xff] %v590
    %689 = vst [vmem:[#allocation5 + $0x260] sm:$0xff] %v591
    %690 = vst [vmem:[#allocation5 + $0x268] sm:$0xff] %v592
    %691 = vst [vmem:[#allocation5 + $0x270] sm:$0xff] %v593
    %692 = vst [vmem:[#allocation5 + $0x278] sm:$0xff] %v594
    %693 = vst [vmem:[#allocation5 + $0x280] sm:$0xff] %v595
    %694 = vst [vmem:[#allocation5 + $0x288] sm:$0xff] %v596
    %695 = vst [vmem:[#allocation5 + $0x290] sm:$0xff] %v597
    %696 = vst [vmem:[#allocation5 + $0x298] sm:$0xff] %v598
    %697 = vst [vmem:[#allocation5 + $0x2a0] sm:$0xff] %v599
    %698 = vst [vmem:[#allocation5 + $0x2a8] sm:$0xff] %v600
    %699 = vst [vmem:[#allocation5 + $0x2b0] sm:$0xff] %v601
    %700 = vst [vmem:[#allocation5 + $0x2b8] sm:$0xff] %v602
    %701 = vst [vmem:[#allocation5 + $0x2c0] sm:$0xff] %v603
    %702 = vst [vmem:[#allocation5 + $0x2c8] sm:$0xff] %v604
    %703 = vst [vmem:[#allocation5 + $0x2d0] sm:$0xff] %v605
    %704 = vst [vmem:[#allocation5 + $0x2d8] sm:$0xff] %v606
    %705 = vst [vmem:[#allocation5 + $0x2e0] sm:$0xff] %v607
    %706 = vst [vmem:[#allocation5 + $0x2e8] sm:$0xff] %v608
    %707 = vst [vmem:[#allocation5 + $0x2f0] sm:$0xff] %v609
    %708 = vst [vmem:[#allocation5 + $0x2f8] sm:$0xff] %v610
    %709 = vst [vmem:[#allocation5 + $0x300] sm:$0xff] %v611
    %710 = vst [vmem:[#allocation5 + $0x308] sm:$0xff] %v612
    // Predicated region
    $region10: #{tpu_custom_call.1} parent=1 // pred_check
      _
    $region11: #{tpu_custom_call.1} parent=1 // pred_check_branch
      %712 = sbr.rel (0) target = $region13
    $region12: #{tpu_custom_call.1} parent=1 // pred_region
      %714 = vsyncadd [#allocation4], 0
      %s715 = sshll.u32 [#allocation5], 4
      %s716 = int_to_ptr.vmem [resolvable:$true] %s715
      %s717 = sshll.u32 %s1, 4
      %s718 = int_to_ptr.hbm [resolvable:$true] %s717
      %723 = dma.vmem_to_hbm [thread:$0]  %s716, 12544, %s718, [#allocation4], 128, 128, 8
    $region13: #{tpu_custom_call.1} parent=1 // pred_fallthru
      _
    // Predicated region
    $region14: #{tpu_custom_call.1} parent=1 // pred_check
      _
    $region15: #{tpu_custom_call.1} parent=1 // pred_check_branch
      %725 = sbr.rel (0) target = $region17
    $region16: #{tpu_custom_call.1} parent=1 // pred_region
      %727 = dma.done [#allocation4], 12544
    $region17: #{tpu_custom_call.1} parent=1 // pred_fallthru
      _
    %728 = vsyncpa [#allocation3], 1
    %729 = vsyncpa [#allocation4], 1

</llo_original>
